<compile_context>
chip_gen: v7x
topology: tpu7x:2x2x1
jax: 0.10.0
libtpu: 0.0.40
codegen_flags: <defaults>
</compile_context>

<pallas_src>
import functools
import math

import jax
import jax.numpy as jnp
from jax import lax
from jax.experimental import pallas as pl
from jax.experimental.pallas import tpu as pltpu


def _self_attention_kernel(x_ref, w_ref, b_ref, out_ref, p_ref, *,
                           hidden_padded, mxu_dtype):
    """Per-grid-step (one batch element):
      x_ref:   (S, F)            input rows for this batch element
      w_ref:   (F, 3*Hp)         [Wq/sqrt(d_k) | Wk | Wv], each padded to Hp lanes
      b_ref:   (1, 3*Hp)         [bq/sqrt(d_k) | bk | bv], zero-padded
      out_ref: (S, Hp)           lane-dense attention output (padding stripped outside)
      p_ref:   (S, S)            attention probabilities
    """
    hp = hidden_padded

    x = x_ref[...]
    w = w_ref[...]
    if mxu_dtype is not None:
        x = x.astype(mxu_dtype)
        w = w.astype(mxu_dtype)

    # Fused QKV projection: one wide MXU matmul, f32 accumulation, f32 bias add.
    qkv = jnp.dot(x, w, preferred_element_type=jnp.float32) + b_ref[...]  # (S, 3*Hp)

    # Lane-tile-aligned slices (offsets 0, Hp, 2*Hp are multiples of 128).
    q = qkv[:, :hp]              # already pre-scaled by 1/sqrt(d_k)
    k = qkv[:, hp:2 * hp]
    v = qkv[:, 2 * hp:]

    if mxu_dtype is not None:
        q_mx, k_mx = q.astype(mxu_dtype), k.astype(mxu_dtype)
    else:
        q_mx, k_mx = q, k

    # scores = q @ k^T, contracting last dims of both (no transpose materialized).
    scores = lax.dot_general(q_mx, k_mx, (((1,), (1,)), ((), ())),
                             preferred_element_type=jnp.float32)          # (S, S)

    # Numerically stable softmax over the last axis, all f32 on VPU/EUP.
    m = jnp.max(scores, axis=-1, keepdims=True)
    e = jnp.exp(scores - m)
    denom = jnp.sum(e, axis=-1, keepdims=True)
    # EUP vrcp (approx): ~1e-3 rel. error, keeps the VALU free next to exp().
    p_attn = e * pl.reciprocal(denom, approx=True)

    if mxu_dtype is not None:
        p_mx, v_mx = p_attn.astype(mxu_dtype), v.astype(mxu_dtype)
    else:
        p_mx, v_mx = p_attn, v

    out = jnp.dot(p_mx, v_mx, preferred_element_type=jnp.float32)         # (S, Hp)

    # Single full-block stores (no per-row indexed stores); out is lane-dense.
    out_ref[...] = out.astype(out_ref.dtype)
    p_ref[...] = p_attn.astype(p_ref.dtype)


def _vmem_budget_bytes(S, F, Hp):
    """Scoped-VMEM limit from actual per-step buffers (f32): 2x for BlockSpec
    double-buffering plus intermediates/headroom, clamped so it also fits
    comfortably inside v7x's 64 MiB physical VMEM."""
    elt = 4
    io_blocks = (S * F) + (F * 3 * Hp) + (3 * Hp) + (S * Hp) + (S * S)
    intermediates = (S * 3 * Hp) + 2 * (S * S) + 2 * (S * Hp)
    budget = (2 * io_blocks + intermediates) * elt + (8 << 20)
    return int(min(max(budget, 16 << 20), 48 << 20))


def self_attention(x, wq, bq, wk, bk, wv, bv, *, mxu_dtype=jnp.bfloat16):
    """x: (B, S, F); wq/wk/wv: (F, H); bq/bk/bv: (H,).

    Returns (out: (B, S, H), p_attn: (B, S, S)), matching
    SelfAttention.forward(input, mask=None, dropout=None).

    mxu_dtype: dtype of MXU operands (default bf16 — native MXU rate on
    v5e/v6e/v7x); accumulation and all softmax math stay f32.  Pass None for
    full-precision operands.
    """
    B, S, F = x.shape
    H = wq.shape[1]

    # Fold 1/sqrt(d_k) into the Q projection; pad each projection to a
    # multiple of 128 lanes so the in-kernel QKV split is lane-tile aligned.
    LANE = 128
    Hp = ((H + LANE - 1) // LANE) * LANE
    scale = 1.0 / math.sqrt(H)

    pad_w = lambda w: jnp.pad(w, ((0, 0), (0, Hp - H)))
    pad_b = lambda b: jnp.pad(b, (0, Hp - H))

    w_qkv = jnp.concatenate([pad_w(wq * scale), pad_w(wk), pad_w(wv)], axis=1)  # (F, 3Hp)
    b_qkv = jnp.concatenate([pad_b(bq * scale), pad_b(bk), pad_b(bv)])
    b_qkv = b_qkv.reshape(1, 3 * Hp)

    kernel = functools.partial(_self_attention_kernel,
                               hidden_padded=Hp, mxu_dtype=mxu_dtype)

    out_padded, p_attn = pl.pallas_call(
        kernel,
        out_shape=(
            jax.ShapeDtypeStruct((B, S, Hp), x.dtype),
            jax.ShapeDtypeStruct((B, S, S), x.dtype),
        ),
        grid_spec=pltpu.PrefetchScalarGridSpec(
            num_scalar_prefetch=0,
            grid=(B,),
            in_specs=[
                pl.BlockSpec((None, S, F), lambda b: (b, 0, 0)),      # x, one batch/step
                pl.BlockSpec((F, 3 * Hp), lambda b: (0, 0)),          # fused weights
                pl.BlockSpec((1, 3 * Hp), lambda b: (0, 0)),          # fused biases
            ],
            out_specs=(
                pl.BlockSpec((None, S, Hp), lambda b: (b, 0, 0)),     # lane-dense out
                pl.BlockSpec((None, S, S), lambda b: (b, 0, 0)),      # p_attn
            ),
        ),
        compiler_params=pltpu.CompilerParams(
            # Batch axis is independent work -> "parallel" lets v7x's two
            # TensorCores split it (no-op on single-TC v5e/v6e).
            dimension_semantics=("parallel",),
            vmem_limit_bytes=_vmem_budget_bytes(S, F, Hp),
        ),
    )(x, w_qkv, b_qkv)

    # Strip lane padding (zero columns) wrapper-side.
    return out_padded[..., :H], p_attn


def _reference(x, wq, bq, wk, bk, wv, bv):
    q = x @ wq + bq
    k = x @ wk + bk
    v = x @ wv + bv
    scores = jnp.einsum("bsh,bth->bst", q, k) / math.sqrt(q.shape[-1])
    p = jax.nn.softmax(scores, axis=-1)
    return jnp.einsum("bst,bth->bsh", p, v), p


if __name__ == "__main__":
    # Small shapes consistent with the module: batch=2, seq=8, feat=16, hidden=32.
    B, S, F, H = 2, 8, 16, 32

    key = jax.random.PRNGKey(0)
    kx, kwq, kbq, kwk, kbk, kwv, kbv = jax.random.split(key, 7)

    x = jax.random.normal(kx, (B, S, F), dtype=jnp.float32)

    # Deterministic PyTorch-style init: U(-1/sqrt(F), 1/sqrt(F)).
    bound = 1.0 / math.sqrt(F)
    init = lambda k, shape: jax.random.uniform(
        k, shape, dtype=jnp.float32, minval=-bound, maxval=bound)
    wq, wk, wv = init(kwq, (F, H)), init(kwk, (F, H)), init(kwv, (F, H))
    bq, bk, bv = init(kbq, (H,)), init(kbk, (H,)), init(kbv, (H,))

    ref_out, ref_p = _reference(x, wq, bq, wk, bk, wv, bv)

    # Default path: bf16 MXU operands, f32 accumulation/softmax.
    out, p_attn = self_attention(x, wq, bq, wk, bk, wv, bv)
    out = jax.block_until_ready(out)
    p_attn = jax.block_until_ready(p_attn)
    assert out.shape == (B, S, H) and p_attn.shape == (B, S, S)
    # bf16 operand rounding (f32 accumulation) + approx reciprocal -> ~1e-2 tol.
    assert jnp.allclose(out, ref_out, atol=2e-2, rtol=2e-2)
    assert jnp.allclose(p_attn, ref_p, atol=2e-2, rtol=2e-2)

    # Full-precision MXU operands: error limited only by approx reciprocal (~1e-3).
    out32, p32 = self_attention(x, wq, bq, wk, bk, wv, bv, mxu_dtype=None)
    out32 = jax.block_until_ready(out32)
    p32 = jax.block_until_ready(p32)
    assert jnp.allclose(out32, ref_out, atol=2e-3, rtol=2e-3)
    assert jnp.allclose(p32, ref_p, atol=2e-3, rtol=2e-3)

    print("KERNEL_OK")
</pallas_src>

<mosaic_0001>
module attributes {stable_mosaic.version = 11 : i64} {
  func.func @_self_attention_kernel(%arg0: i32, %arg1: memref<1x8x16xf32, #tpu.memory_space<vmem>>, %arg2: memref<16x384xf32, #tpu.memory_space<vmem>>, %arg3: memref<1x384xf32, #tpu.memory_space<vmem>>, %arg4: memref<1x8x128xf32, #tpu.memory_space<vmem>>, %arg5: memref<1x8x8xf32, #tpu.memory_space<vmem>>) attributes {dimension_semantics = [#tpu.dimension_semantics<parallel>], iteration_bounds = array<i64: 2>, scalar_prefetch = 0 : i64, scratch_operands = 0 : i64, tpu.core_type = #tpu.core_type<tc>, window_params = [{transform_indices = @transform_0, window_bounds = array<i64: 1, 8, 16>}, {pipeline_mode = #tpu.pipeline_mode<synchronous>, transform_indices = @transform_1, window_bounds = array<i64: 16, 384>}, {pipeline_mode = #tpu.pipeline_mode<synchronous>, transform_indices = @transform_2, window_bounds = array<i64: 1, 384>}, {transform_indices = @transform_3, window_bounds = array<i64: 1, 8, 128>}, {transform_indices = @transform_4, window_bounds = array<i64: 1, 8, 8>}]} {
    %c0 = arith.constant 0 : index
    %c0_0 = arith.constant 0 : index
    %c0_1 = arith.constant 0 : index
    %0 = vector.load %arg1[%c0, %c0_0, %c0_1] : memref<1x8x16xf32, #tpu.memory_space<vmem>>, vector<1x8x16xf32>
    %1 = vector.shape_cast %0 : vector<1x8x16xf32> to vector<8x16xf32>
    %c0_2 = arith.constant 0 : index
    %c0_3 = arith.constant 0 : index
    %2 = vector.load %arg2[%c0_2, %c0_3] : memref<16x384xf32, #tpu.memory_space<vmem>>, vector<16x384xf32>
    %3 = arith.truncf %1 : vector<8x16xf32> to vector<8x16xbf16>
    %4 = arith.truncf %2 : vector<16x384xf32> to vector<16x384xbf16>
    %cst = arith.constant dense<0.000000e+00> : vector<8x384xf32>
    %5 = tpu.matmul %3, %4, %cst {dimension_numbers = #tpu.dot_dimension_numbers<[1], [0], [0], [1], [0, 0, 1, 1], [], []>} : vector<8x16xbf16>, vector<16x384xbf16>, vector<8x384xf32> -> vector<8x384xf32>
    %c0_4 = arith.constant 0 : index
    %c0_5 = arith.constant 0 : index
    %6 = vector.load %arg3[%c0_4, %c0_5] : memref<1x384xf32, #tpu.memory_space<vmem>>, vector<1x384xf32>
    %7 = vector.broadcast %6 : vector<1x384xf32> to vector<8x384xf32>
    %8 = arith.addf %5, %7 : vector<8x384xf32>
    %9 = vector.extract_strided_slice %8 {offsets = [0, 0], sizes = [8, 128], strides = [1, 1]} : vector<8x384xf32> to vector<8x128xf32>
    %10 = vector.extract_strided_slice %8 {offsets = [0, 128], sizes = [8, 128], strides = [1, 1]} : vector<8x384xf32> to vector<8x128xf32>
    %11 = vector.extract_strided_slice %8 {offsets = [0, 256], sizes = [8, 128], strides = [1, 1]} : vector<8x384xf32> to vector<8x128xf32>
    %12 = arith.truncf %9 : vector<8x128xf32> to vector<8x128xbf16>
    %13 = arith.truncf %10 : vector<8x128xf32> to vector<8x128xbf16>
    %cst_6 = arith.constant dense<0.000000e+00> : vector<8x8xf32>
    %14 = tpu.matmul %12, %13, %cst_6 {dimension_numbers = #tpu.dot_dimension_numbers<[1], [1], [0], [0], [0, 0, 1, 0], [], []>} : vector<8x128xbf16>, vector<8x128xbf16>, vector<8x8xf32> -> vector<8x8xf32>
    %cst_7 = arith.constant dense<0xFF800000> : vector<8xf32>
    %15 = vector.multi_reduction <maximumf>, %14, %cst_7 [1] : vector<8x8xf32> to vector<8xf32>
    %16 = vector.shape_cast %15 : vector<8xf32> to vector<8x1xf32>
    %17 = vector.broadcast %16 : vector<8x1xf32> to vector<8x8xf32>
    %18 = arith.subf %14, %17 : vector<8x8xf32>
    %19 = math.exp %18 : vector<8x8xf32>
    %cst_8 = arith.constant dense<0.000000e+00> : vector<8xf32>
    %20 = vector.multi_reduction <add>, %19, %cst_8 [1] : vector<8x8xf32> to vector<8xf32>
    %21 = vector.shape_cast %20 : vector<8xf32> to vector<8x1xf32>
    %22 = tpu.reciprocal %21 {approx = true} : vector<8x1xf32> -> vector<8x1xf32>
    %23 = vector.broadcast %22 : vector<8x1xf32> to vector<8x8xf32>
    %24 = arith.mulf %19, %23 : vector<8x8xf32>
    %25 = arith.truncf %24 : vector<8x8xf32> to vector<8x8xbf16>
    %26 = arith.truncf %11 : vector<8x128xf32> to vector<8x128xbf16>
    %cst_9 = arith.constant dense<0.000000e+00> : vector<8x128xf32>
    %27 = tpu.matmul %25, %26, %cst_9 {dimension_numbers = #tpu.dot_dimension_numbers<[1], [0], [0], [1], [0, 0, 1, 1], [], []>} : vector<8x8xbf16>, vector<8x128xbf16>, vector<8x128xf32> -> vector<8x128xf32>
    %c0_10 = arith.constant 0 : index
    %c0_11 = arith.constant 0 : index
    %c0_12 = arith.constant 0 : index
    %28 = vector.load %arg4[%c0_10, %c0_11, %c0_12] : memref<1x8x128xf32, #tpu.memory_space<vmem>>, vector<1x8x128xf32>
    %29 = vector.shape_cast %28 : vector<1x8x128xf32> to vector<8x128xf32>
    %30 = vector.shape_cast %27 : vector<8x128xf32> to vector<1x8x128xf32>
    tpu.vector_store %arg4[%c0_10, %c0_11, %c0_12], %30 {strides = array<i32>} : memref<1x8x128xf32, #tpu.memory_space<vmem>>, vector<1x8x128xf32>,
    %c0_13 = arith.constant 0 : index
    %c0_14 = arith.constant 0 : index
    %c0_15 = arith.constant 0 : index
    %31 = vector.load %arg5[%c0_13, %c0_14, %c0_15] : memref<1x8x8xf32, #tpu.memory_space<vmem>>, vector<1x8x8xf32>
    %32 = vector.shape_cast %31 : vector<1x8x8xf32> to vector<8x8xf32>
    %33 = vector.shape_cast %24 : vector<8x8xf32> to vector<1x8x8xf32>
    tpu.vector_store %arg5[%c0_13, %c0_14, %c0_15], %33 {strides = array<i32>} : memref<1x8x8xf32, #tpu.memory_space<vmem>>, vector<1x8x8xf32>,
    return
  }
  func.func @transform_0(%arg0: i32) -> (i32, i32, i32) {
    %c0_i32 = arith.constant 0 : i32
    %c0_i32_0 = arith.constant 0 : i32
    %c0_i32_1 = arith.constant 0 : i32
    return %arg0, %c0_i32, %c0_i32_0 : i32, i32, i32
  }
  func.func @transform_1(%arg0: i32) -> (i32, i32) {
    %c0_i32 = arith.constant 0 : i32
    %c0_i32_0 = arith.constant 0 : i32
    %c0_i32_1 = arith.constant 0 : i32
    return %c0_i32, %c0_i32_0 : i32, i32
  }
  func.func @transform_2(%arg0: i32) -> (i32, i32) {
    %c0_i32 = arith.constant 0 : i32
    %c0_i32_0 = arith.constant 0 : i32
    %c0_i32_1 = arith.constant 0 : i32
    return %c0_i32, %c0_i32_0 : i32, i32
  }
  func.func @transform_3(%arg0: i32) -> (i32, i32, i32) {
    %c0_i32 = arith.constant 0 : i32
    %c0_i32_0 = arith.constant 0 : i32
    %c0_i32_1 = arith.constant 0 : i32
    return %arg0, %c0_i32, %c0_i32_0 : i32, i32, i32
  }
  func.func @transform_4(%arg0: i32) -> (i32, i32, i32) {
    %c0_i32 = arith.constant 0 : i32
    %c0_i32_0 = arith.constant 0 : i32
    %c0_i32_1 = arith.constant 0 : i32
    return %arg0, %c0_i32, %c0_i32_0 : i32, i32, i32
  }
}

</mosaic_0001>

<llo_original>
// kernel: tpu_custom_call.1
$region0: #{tpu_custom_call.1}
  #allocation0 [shape = 'u32[]', space=smem, size = 0x4, offset = 0x4, fixed_abs, tag = 'smem constant byte address 0x4 - core index']
  #allocation1 [shape = 'u32[144,128]{1,0:T(1,128)}', space=vmem, size = 0x12000, scoped, tag = 'internal scratch']
  %s0 = inlined_call_operand.hbm [shape: f32[2,8,16], index: 0, kind: input, shape index: {}]
  %s1 = inlined_call_operand.hbm [shape: f32[16,384], index: 1, kind: input, shape index: {}]
  %s2 = inlined_call_operand.vmem [shape: f32[1,384], index: 2, kind: input, shape index: {}]
  %s3 = inlined_call_operand.hbm [shape: f32[2,8,128], index: 3, kind: output, shape index: {0}]
  %s4 = inlined_call_operand.hbm [shape: f32[2,8,8], index: 4, kind: output, shape index: {1}]
  %5 = xla_tuple %s3, %s4
  %s6 = sld [smem:[#allocation0]]
  $region61: #{tpu_custom_call.1} parent=0
    _
  %s8 = ssub.s32 1, %s6
  %s9 = scalar_select 0, %s8, %s6
  $region1: #{tpu_custom_call.1} parent=0
    #allocation2 [shape = 'u8[8192]{0}', space=vmem, size = 0x2000, scoped, tag = 'input window, operand 0']
    #allocation3 [shape = 's32[2]{0}', space=sflag, size = 0x8, scoped, tag = 'scoped memory for tpu_custom_call.1']
    #allocation4 [shape = 's32[2]{0}', space=sflag, size = 0x8, scoped, tag = 'scoped memory for tpu_custom_call.1']
    #allocation5 [shape = 'u8[24576]{0}', space=vmem, size = 0x6000, scoped, tag = 'input window, operand 1, single buffered']
    #allocation6 [shape = 's32[1]{0}', space=sflag, size = 0x4, scoped, tag = 'scoped memory for tpu_custom_call.1']
    #allocation7 [shape = 'u8[8192]{0}', space=vmem, size = 0x2000, scoped, tag = 'output window, operand 0']
    #allocation8 [shape = 'u8[8192]{0}', space=vmem, size = 0x2000, scoped, tag = 'output window, operand 1']
    #allocation9 [shape = 's32[2]{0}', space=sflag, size = 0x8, scoped, tag = 'scoped memory for tpu_custom_call.1']
    %10 = vsyncpa [#allocation3], 0
    %s11 = scalar_lea.sflag [#allocation3], 1
    %12 = vsyncpa %s11, 0
    %13 = vsyncpa [#allocation6], 0
    %14 = vsyncpa [#allocation4], 0
    %s15 = scalar_lea.sflag [#allocation4], 1
    %16 = vsyncpa %s15, 0
    %17 = vsyncpa [#allocation9], 0
    %s18 = scalar_lea.sflag [#allocation9], 1
    %19 = vsyncpa %s18, 0
    loop: start=0, step=1, limit=4
    $region2: #{tpu_custom_call.1} parent=1 // loop_pre_header
      _
    $region3: #{tpu_custom_call.1} parent=1 // loop_header
      %s21 = sphi 0, %s25
      %p22 = scmp.ge.s32.totalorder %s21, 4
      %s31 = sphi 0, %s33
      %s34 = sphi 0, %s31
      %s35 = sphi 0, %s34
      %s51 = sphi 0, %s35
      %s55 = sphi 0, %s55
      %s57 = sphi 0, %s55
      %s58 = sphi 0, %s57
      %s72 = sphi 0, %s58
      %s76 = sphi 0, %s76
      %s78 = sphi 0, %s76
      %s79 = sphi 0, %s78
      %s93 = sphi 0, %s79
      %s99 = sphi 0, %s101
      %s102 = sphi 0, %s99
      %s103 = sphi 0, %s102
      %s119 = sphi 0, %s103
      %s125 = sphi 0, %s127
      %s128 = sphi 0, %s125
      %s129 = sphi 0, %s128
      %s145 = sphi 0, %s129
    $region4: #{tpu_custom_call.1} parent=1 // loop_header_branch
      %24 = sbr.rel (%p22) target = $region8
    $region5: #{tpu_custom_call.1} parent=1 // loop_body
      %s26 = ssub.s32 %s21, 1
      %s27 = ssub.s32 %s21, 2
      %s28 = sadd.s32 %s21, 1
      %s29 = ssub.s32 %s21, %s28
      %p30 = scmp.eq.s32.totalorder %s29, 0
      %s32 = sadd.s32 %s31, 1
      %s33 = scalar_select %p30, %s31, %s32
      %p36 = pneg %p30
      %p37 = scmp.eq.s32.totalorder %s21, 1
      %p38 = por %p36, %p37
      %p39 = scmp.ne.s32.totalorder %s31, %s34
      %p40 = scmp.eq.s32.totalorder %s21, 0
      %p41 = por %p39, %p40
      %p42 = scmp.ne.s32.totalorder %s31, %s34
      %p43 = scmp.eq.s32.totalorder %s26, 1
      %p44 = por %p42, %p43
      %p45 = scmp.ne.s32.totalorder %s34, %s35
      %p46 = scmp.eq.s32.totalorder %s26, 0
      %p47 = por %p45, %p46
      %p48 = scmp.ne.s32.totalorder %s34, %s35
      %p49 = scmp.eq.s32.totalorder %s27, 1
      %p50 = por %p48, %p49
      %p52 = scmp.ne.s32.totalorder %s35, %s51
      %p53 = scmp.eq.s32.totalorder %s27, 0
      %p54 = por %p52, %p53
      %s56 = sadd.s32 %s55, 1
      %p59 = scmp.eq.s32.totalorder %s21, 1
      %p60 = scmp.ne.s32.totalorder %s55, %s57
      %p61 = scmp.eq.s32.totalorder %s21, 0
      %p62 = por %p60, %p61
      %p63 = scmp.ne.s32.totalorder %s55, %s57
      %p64 = scmp.eq.s32.totalorder %s26, 1
      %p65 = por %p63, %p64
      %p66 = scmp.ne.s32.totalorder %s57, %s58
      %p67 = scmp.eq.s32.totalorder %s26, 0
      %p68 = por %p66, %p67
      %p69 = scmp.ne.s32.totalorder %s57, %s58
      %p70 = scmp.eq.s32.totalorder %s27, 1
      %p71 = por %p69, %p70
      %p73 = scmp.ne.s32.totalorder %s58, %s72
      %p74 = scmp.eq.s32.totalorder %s27, 0
      %p75 = por %p73, %p74
      %s77 = sadd.s32 %s76, 1
      %p80 = scmp.eq.s32.totalorder %s21, 1
      %p81 = scmp.ne.s32.totalorder %s76, %s78
      %p82 = scmp.eq.s32.totalorder %s21, 0
      %p83 = por %p81, %p82
      %p84 = scmp.ne.s32.totalorder %s76, %s78
      %p85 = scmp.eq.s32.totalorder %s26, 1
      %p86 = por %p84, %p85
      %p87 = scmp.ne.s32.totalorder %s78, %s79
      %p88 = scmp.eq.s32.totalorder %s26, 0
      %p89 = por %p87, %p88
      %p90 = scmp.ne.s32.totalorder %s78, %s79
      %p91 = scmp.eq.s32.totalorder %s27, 1
      %p92 = por %p90, %p91
      %p94 = scmp.ne.s32.totalorder %s79, %s93
      %p95 = scmp.eq.s32.totalorder %s27, 0
      %p96 = por %p94, %p95
      %s97 = ssub.s32 %s21, %s28
      %p98 = scmp.eq.s32.totalorder %s97, 0
      %s100 = sadd.s32 %s99, 1
      %s101 = scalar_select %p98, %s99, %s100
      %p104 = pneg %p98
      %p105 = scmp.eq.s32.totalorder %s21, 1
      %p106 = por %p104, %p105
      %p107 = scmp.ne.s32.totalorder %s99, %s102
      %p108 = scmp.eq.s32.totalorder %s21, 0
      %p109 = por %p107, %p108
      %p110 = scmp.ne.s32.totalorder %s99, %s102
      %p111 = scmp.eq.s32.totalorder %s26, 1
      %p112 = por %p110, %p111
      %p113 = scmp.ne.s32.totalorder %s102, %s103
      %p114 = scmp.eq.s32.totalorder %s26, 0
      %p115 = por %p113, %p114
      %p116 = scmp.ne.s32.totalorder %s102, %s103
      %p117 = scmp.eq.s32.totalorder %s27, 1
      %p118 = por %p116, %p117
      %p120 = scmp.ne.s32.totalorder %s103, %s119
      %p121 = scmp.eq.s32.totalorder %s27, 0
      %p122 = por %p120, %p121
      %s123 = ssub.s32 %s21, %s28
      %p124 = scmp.eq.s32.totalorder %s123, 0
      %s126 = sadd.s32 %s125, 1
      %s127 = scalar_select %p124, %s125, %s126
      %p130 = pneg %p124
      %p131 = scmp.eq.s32.totalorder %s21, 1
      %p132 = por %p130, %p131
      %p133 = scmp.ne.s32.totalorder %s125, %s128
      %p134 = scmp.eq.s32.totalorder %s21, 0
      %p135 = por %p133, %p134
      %p136 = scmp.ne.s32.totalorder %s125, %s128
      %p137 = scmp.eq.s32.totalorder %s26, 1
      %p138 = por %p136, %p137
      %p139 = scmp.ne.s32.totalorder %s128, %s129
      %p140 = scmp.eq.s32.totalorder %s26, 0
      %p141 = por %p139, %p140
      %p142 = scmp.ne.s32.totalorder %s128, %s129
      %p143 = scmp.eq.s32.totalorder %s27, 1
      %p144 = por %p142, %p143
      %p146 = scmp.ne.s32.totalorder %s129, %s145
      %p147 = scmp.eq.s32.totalorder %s27, 0
      %p148 = por %p146, %p147
      %p149 = scmp.le.s32.totalorder 1, %s21
      %p150 = scmp.lt.s32.totalorder %s21, 3
      %p151 = pnand %p149, %p150
      %p152 = pneg %p151
      // Predicated region
      $region9: #{tpu_custom_call.1} parent=5 // pred_check
        _
      $region10: #{tpu_custom_call.1} parent=5 // pred_check_branch
        %154 = sbr.rel (%p151) target = $region12
      $region11: #{tpu_custom_call.1} parent=5 // pred_region
        %s155 = ssub.s32 %s21, 1
        // Predicated region
        $region13: #{tpu_custom_call.1} parent=11 // pred_check
          %p156 = pneg %p68
        $region14: #{tpu_custom_call.1} parent=11 // pred_check_branch
          %158 = sbr.rel (%p156) target = $region16
        $region15: #{tpu_custom_call.1} parent=11 // pred_region
          %s160 = ssub.s32 768, 768
          %161 = vsyncadd [#allocation6], %s160
          %s162 = sshll.u32 [#allocation5], 4
          %s163 = int_to_ptr.vmem [resolvable:$true] %s162
          %168 = dma.hbm_to_vmem [thread:$0]  %s1, 768, %s163, [#allocation6], 384, 384, 24
        $region16: #{tpu_custom_call.1} parent=11 // pred_fallthru
          _
        // Predicated region
        $region17: #{tpu_custom_call.1} parent=11 // pred_check
          %p169 = pneg %p89
        $region18: #{tpu_custom_call.1} parent=11 // pred_check_branch
          %171 = sbr.rel (%p169) target = $region20
        $region19: #{tpu_custom_call.1} parent=11 // pred_region
          _
        $region20: #{tpu_custom_call.1} parent=11 // pred_fallthru
          _
      $region12: #{tpu_custom_call.1} parent=5 // pred_fallthru
        _
      %p172 = scmp.lt.s32.totalorder %s21, 2
      // Predicated region
      $region21: #{tpu_custom_call.1} parent=5 // pred_check
        %p173 = pneg %p172
      $region22: #{tpu_custom_call.1} parent=5 // pred_check_branch
        %175 = sbr.rel (%p173) target = $region24
      $region23: #{tpu_custom_call.1} parent=5 // pred_region
        // Predicated region
        $region25: #{tpu_custom_call.1} parent=23 // pred_check
          %p176 = pneg %p41
        $region26: #{tpu_custom_call.1} parent=23 // pred_check_branch
          %178 = sbr.rel (%p176) target = $region28
        $region27: #{tpu_custom_call.1} parent=23 // pred_region
          %s179 = sand.u32 %s31, 1
          %s180 = scalar_lea.sflag [#allocation3], %s179
          %s181 = sand.u32 %s31, 1
          %s182 = smul.addr %s181, 8
          %s183 = scalar_lea.vmem [#allocation2], %s182
          %s185 = ssub.s32 128, 128
          %186 = vsyncadd %s180, %s185
          %s187 = smul.addr %s21, 128
          %s188 = scalar_lea.hbm %s0, %s187
          %s190 = sshll.u32 %s183, 4
          %s191 = int_to_ptr.vmem [resolvable:$true] %s190
          %193 = dma.hbm_to_vmem [thread:$0]  %s188, 128, %s191, %s180
        $region28: #{tpu_custom_call.1} parent=23 // pred_fallthru
          _
      $region24: #{tpu_custom_call.1} parent=5 // pred_fallthru
        _
      %p194 = scmp.le.s32.totalorder 1, %s21
      %p195 = scmp.lt.s32.totalorder %s21, 3
      %p196 = pnand %p194, %p195
      %p197 = pneg %p196
      // Predicated region
      $region29: #{tpu_custom_call.1} parent=5 // pred_check
        _
      $region30: #{tpu_custom_call.1} parent=5 // pred_check_branch
        %199 = sbr.rel (%p196) target = $region32
      $region31: #{tpu_custom_call.1} parent=5 // pred_region
        %s200 = ssub.s32 %s21, 1
        %s201 = sand.u32 %s34, 1
        %s202 = scalar_lea.sflag [#allocation3], %s201
        %s203 = sand.u32 %s34, 1
        %s204 = smul.addr %s203, 8
        %s205 = scalar_lea.vmem [#allocation2], %s204
        // Predicated region
        $region33: #{tpu_custom_call.1} parent=31 // pred_check
          %p206 = pneg %p47
        $region34: #{tpu_custom_call.1} parent=31 // pred_check_branch
          %208 = sbr.rel (%p206) target = $region36
        $region35: #{tpu_custom_call.1} parent=31 // pred_region
          %209 = dma.done %s202, 128
        $region36: #{tpu_custom_call.1} parent=31 // pred_fallthru
          _
        // Predicated region
        $region37: #{tpu_custom_call.1} parent=31 // pred_check
          %p210 = pneg %p68
        $region38: #{tpu_custom_call.1} parent=31 // pred_check_branch
          %212 = sbr.rel (%p210) target = $region40
        $region39: #{tpu_custom_call.1} parent=31 // pred_region
          %213 = dma.done [#allocation6], 768
        $region40: #{tpu_custom_call.1} parent=31 // pred_fallthru
          _
        %s214 = sand.u32 %s34, 1
        %s215 = scalar_lea.sflag [#allocation3], %s214
        %s216 = sand.u32 %s34, 1
        %s217 = smul.addr %s216, 8
        %s218 = scalar_lea.vmem [#allocation2], %s217
        %p219 = pneg %p47
        %p220 = pneg %p44
        %p221 = pneg %p68
        %p222 = pneg %p65
        %p223 = pneg %p89
        %p224 = pneg %p86
        %p225 = pneg %p115
        %p226 = pneg %p112
        %s227 = sand.u32 %s102, 1
        %s228 = scalar_lea.sflag [#allocation4], %s227
        %s229 = sand.u32 %s102, 1
        %s230 = smul.addr %s229, 8
        %s231 = scalar_lea.vmem [#allocation7], %s230
        %p232 = pneg %p141
        %p233 = pneg %p138
        %s234 = sand.u32 %s128, 1
        %s235 = scalar_lea.sflag [#allocation9], %s234
        %s236 = sand.u32 %s128, 1
        %s237 = smul.addr %s236, 8
        %s238 = scalar_lea.vmem [#allocation8], %s237
        %v240 = vld [vmem:[%s205] sm:$0xff]
        %v241 = vld [vmem:[#allocation5] sm:$0xff]
        %v242 = vld [vmem:[#allocation5 + $0x8] sm:$0xff]
        %v243 = vld [vmem:[#allocation5 + $0x10] sm:$0xff]
        %v244 = vld [vmem:[#allocation5 + $0x18] sm:$0xff]
        %v245 = vld [vmem:[#allocation5 + $0x20] sm:$0xff]
        %v246 = vld [vmem:[#allocation5 + $0x28] sm:$0xff]
        %v247 = vpack.c.bf16 %v240, %v240
        %v248 = vpack.c.bf16 %v244, %v241
        %v249 = vpack.c.bf16 %v245, %v242
        %v250 = vpack.c.bf16 %v246, %v243
        %v251 = vld [vmem:[%s2] sm:$0x7]
        %v253 = vlaneseq
        %v254 = vshrl.u32 %v253, 7
        %v255 = vsub.s32 0, %v254
        %v256 = vrot.slane %v251, %v255
        %v257 = vlaneseq
        %v258 = vshrl.u32 %v257, 7
        %v259 = vsub.s32 1, %v258
        %v260 = vrot.slane %v251, %v259
        %v261 = vlaneseq
        %v262 = vshrl.u32 %v261, 7
        %v263 = vsub.s32 2, %v262
        %v264 = vrot.slane %v251, %v263
        %vm268 = vcmask 130048
        %v270 = vsel %vm268, %v247, 0
        %272 = vmatprep.subr.bf16.mxu0 %v249
        %273 = vmatpush1.bf16.msra.mxu0 %v248
        %274 = vmatprep.subr.bf16.mxu0 0
        %275 = vmatpush1.bf16.msra.mxu0 0
        %276 = vmatprep.subr.bf16.mxu0 0
        %277 = vmatpush1.bf16.msra.mxu0 0
        %278 = vmatprep.subr.bf16.mxu0 0
        %279 = vmatpush1.bf16.msra.mxu0 0
        %280 = vmatprep.subr.bf16.mxu0 0
        %281 = vmatpush1.bf16.msra.mxu0 0
        %282 = vmatprep.subr.bf16.mxu0 0
        %283 = vmatpush1.bf16.msra.mxu0 0
        %284 = vmatprep.subr.bf16.mxu0 0
        %285 = vmatpush1.bf16.msra.mxu0 0
        %286 = vmatprep.subr.bf16.mxu0 0
        %287 = vmatpush1.bf16.msra.mxu0 0
        %288 = vmatprep.subr.bf16.mxu0 0
        %289 = vmatpush1.bf16.msra.mxu0 0
        %290 = vmatprep.subr.bf16.mxu0 0
        %291 = vmatpush1.bf16.msra.mxu0 0
        %292 = vmatprep.subr.bf16.mxu0 0
        %293 = vmatpush1.bf16.msra.mxu0 0
        %294 = vmatprep.subr.bf16.mxu0 0
        %295 = vmatpush1.bf16.msra.mxu0 0
        %296 = vmatprep.subr.bf16.mxu0 0
        %297 = vmatpush1.bf16.msra.mxu0 0
        %298 = vmatprep.subr.bf16.mxu0 0
        %299 = vmatpush1.bf16.msra.mxu0 0
        %300 = vmatprep.subr.bf16.mxu0 0
        %301 = vmatpush1.bf16.msra.mxu0 0
        %302 = vmatprep.subr.bf16.mxu0 0
        %303 = vmatpush1.bf16.msra.mxu0 0
        %304 = vmatprep.mubr.bf16.mxu0 0
        %305 = vmatmul.mubr.bf16.gmra.mrb[0].mxu0 %v270
        %v306 = vpop.f32.mrb[0].mxu0
        %v307 = vadd.f32 %v256, %v306
        %v308 = vpop.f32.mrb[0].mxu0
        %v309 = vadd.f32 %v260, %v308
        %v310 = vpop.f32.mrb[0].mxu0
        %v311 = vpop.f32.mrb[0].mxu0
        %312 = vdwg.mxu0
        %313 = vmatprep.subr.bf16.mxu0 0
        %314 = vmatpush1.bf16.msra.mxu0 %v250
        %315 = vmatprep.subr.bf16.mxu0 0
        %316 = vmatpush1.bf16.msra.mxu0 0
        %317 = vmatprep.subr.bf16.mxu0 0
        %318 = vmatpush1.bf16.msra.mxu0 0
        %319 = vmatprep.subr.bf16.mxu0 0
        %320 = vmatpush1.bf16.msra.mxu0 0
        %321 = vmatprep.subr.bf16.mxu0 0
        %322 = vmatpush1.bf16.msra.mxu0 0
        %323 = vmatprep.subr.bf16.mxu0 0
        %324 = vmatpush1.bf16.msra.mxu0 0
        %325 = vmatprep.subr.bf16.mxu0 0
        %326 = vmatpush1.bf16.msra.mxu0 0
        %327 = vmatprep.subr.bf16.mxu0 0
        %328 = vmatpush1.bf16.msra.mxu0 0
        %329 = vmatprep.subr.bf16.mxu0 0
        %330 = vmatpush1.bf16.msra.mxu0 0
        %331 = vmatprep.subr.bf16.mxu0 0
        %332 = vmatpush1.bf16.msra.mxu0 0
        %333 = vmatprep.subr.bf16.mxu0 0
        %334 = vmatpush1.bf16.msra.mxu0 0
        %335 = vmatprep.subr.bf16.mxu0 0
        %336 = vmatpush1.bf16.msra.mxu0 0
        %337 = vmatprep.subr.bf16.mxu0 0
        %338 = vmatpush1.bf16.msra.mxu0 0
        %339 = vmatprep.subr.bf16.mxu0 0
        %340 = vmatpush1.bf16.msra.mxu0 0
        %341 = vmatprep.subr.bf16.mxu0 0
        %342 = vmatpush1.bf16.msra.mxu0 0
        %343 = vmatprep.subr.bf16.mxu0 0
        %344 = vmatpush1.bf16.msra.mxu0 0
        %345 = vmatprep.mubr.bf16.mxu0 0
        %346 = vmatmul.mubr.bf16.gmra.mrb[0].mxu0 %v270
        %v347 = vpop.f32.mrb[0].mxu0
        %v348 = vadd.f32 %v264, %v347
        %v349 = vpop.f32.mrb[0].mxu0
        %v350 = vpop.f32.mrb[0].mxu0
        %v351 = vpop.f32.mrb[0].mxu0
        %352 = vdwg.mxu0
        %v353 = vpack.c.bf16 %v307, %v307
        %v354 = vpack.c.bf16 %v309, %v309
        %355 = vmatprep.subr.bf16.mxu0 0
        %356 = vmatpush1.bf16.xpose.msra.mxu0 %v354
        %357 = vmatprep.subr.bf16.mxu0 0
        %358 = vmatpush1.bf16.xpose.msra.mxu0 0
        %359 = vmatprep.subr.bf16.mxu0 0
        %360 = vmatpush1.bf16.xpose.msra.mxu0 0
        %361 = vmatprep.subr.bf16.mxu0 0
        %362 = vmatpush1.bf16.xpose.msra.mxu0 0
        %363 = vmatprep.subr.bf16.mxu0 0
        %364 = vmatpush1.bf16.xpose.msra.mxu0 0
        %365 = vmatprep.subr.bf16.mxu0 0
        %366 = vmatpush1.bf16.xpose.msra.mxu0 0
        %367 = vmatprep.subr.bf16.mxu0 0
        %368 = vmatpush1.bf16.xpose.msra.mxu0 0
        %369 = vmatprep.subr.bf16.mxu0 0
        %370 = vmatpush1.bf16.xpose.msra.mxu0 0
        %371 = vmatprep.subr.bf16.mxu0 0
        %372 = vmatpush1.bf16.xpose.msra.mxu0 0
        %373 = vmatprep.subr.bf16.mxu0 0
        %374 = vmatpush1.bf16.xpose.msra.mxu0 0
        %375 = vmatprep.subr.bf16.mxu0 0
        %376 = vmatpush1.bf16.xpose.msra.mxu0 0
        %377 = vmatprep.subr.bf16.mxu0 0
        %378 = vmatpush1.bf16.xpose.msra.mxu0 0
        %379 = vmatprep.subr.bf16.mxu0 0
        %380 = vmatpush1.bf16.xpose.msra.mxu0 0
        %381 = vmatprep.subr.bf16.mxu0 0
        %382 = vmatpush1.bf16.xpose.msra.mxu0 0
        %383 = vmatprep.subr.bf16.mxu0 0
        %384 = vmatpush1.bf16.xpose.msra.mxu0 0
        %385 = vmatprep.subr.bf16.mxu0 0
        %386 = vmatpush1.bf16.xpose.msra.mxu0 0
        %387 = vmatprep.mubr.bf16.mxu0 0
        %388 = vmatmul.mubr.bf16.gmra.mrb[0].mxu0 %v353
        %v389 = vpop.f32.mrb[0].mxu0
        %v390 = vadd.f32 0.0, %v389
        %v391 = vpop.f32.mrb[0].mxu0
        %v392 = vpop.f32.mrb[0].mxu0
        %v393 = vpop.f32.mrb[0].mxu0
        %394 = vdwg.mxu0
        %vm395 = vcmask 64512
        %v396 = vsel %vm395, %v390, -inf
        %397 = vmax.xlane.f32.xlu0 %v396
        %v398 = vpop.xlane.xlu0 %397
        %v399 = vsub.f32 %v390, %v398
        %v400 = vmul.f32 %v399, 1.442695
        %v401 = vpow.pop %v400
        %v402 = vsel %vm395, %v401, 0.0
        %403 = vadd.xlane.f32.xlu0 %v402
        %v404 = vpop.xlane.xlu0 %403
        %v405 = vrcp.pop %v404
        %v406 = vmul.f32 %v401, %v405
        %v407 = vpack.c.bf16 %v406, %v406
        %v408 = vpack.c.bf16 %v348, %v348
        %v410 = vsel %vm395, %v407, 0
        %vm412 = vcmask 1043456
        %v414 = vsel %vm412, %v408, 0
        %416 = vmatprep.subr.bf16.mxu0 0
        %417 = vmatpush1.bf16.msra.mxu0 %v414
        %418 = vmatprep.subr.bf16.mxu0 0
        %419 = vmatpush1.bf16.msra.mxu0 0
        %420 = vmatprep.subr.bf16.mxu0 0
        %421 = vmatpush1.bf16.msra.mxu0 0
        %422 = vmatprep.subr.bf16.mxu0 0
        %423 = vmatpush1.bf16.msra.mxu0 0
        %424 = vmatprep.subr.bf16.mxu0 0
        %425 = vmatpush1.bf16.msra.mxu0 0
        %426 = vmatprep.subr.bf16.mxu0 0
        %427 = vmatpush1.bf16.msra.mxu0 0
        %428 = vmatprep.subr.bf16.mxu0 0
        %429 = vmatpush1.bf16.msra.mxu0 0
        %430 = vmatprep.subr.bf16.mxu0 0
        %431 = vmatpush1.bf16.msra.mxu0 0
        %432 = vmatprep.subr.bf16.mxu0 0
        %433 = vmatpush1.bf16.msra.mxu0 0
        %434 = vmatprep.subr.bf16.mxu0 0
        %435 = vmatpush1.bf16.msra.mxu0 0
        %436 = vmatprep.subr.bf16.mxu0 0
        %437 = vmatpush1.bf16.msra.mxu0 0
        %438 = vmatprep.subr.bf16.mxu0 0
        %439 = vmatpush1.bf16.msra.mxu0 0
        %440 = vmatprep.subr.bf16.mxu0 0
        %441 = vmatpush1.bf16.msra.mxu0 0
        %442 = vmatprep.subr.bf16.mxu0 0
        %443 = vmatpush1.bf16.msra.mxu0 0
        %444 = vmatprep.subr.bf16.mxu0 0
        %445 = vmatpush1.bf16.msra.mxu0 0
        %446 = vmatprep.subr.bf16.mxu0 0
        %447 = vmatpush1.bf16.msra.mxu0 0
        %448 = vmatprep.mubr.bf16.mxu0 0
        %449 = vmatmul.mubr.bf16.gmra.mrb[0].mxu0 %v410
        %v450 = vpop.f32.mrb[0].mxu0
        %v451 = vadd.f32 0.0, %v450
        %v452 = vpop.f32.mrb[0].mxu0
        %v453 = vpop.f32.mrb[0].mxu0
        %v454 = vpop.f32.mrb[0].mxu0
        %455 = vdwg.mxu0
        %456 = vst [vmem:[%s231] sm:$0xff] %v451
        %457 = vst.msk [vmem:[%s238] sm:$0xff] %vm395, %v406
        %s458 = sand.u32 %s102, 1
        %s459 = scalar_lea.sflag [#allocation4], %s458
        %s460 = sand.u32 %s102, 1
        %s461 = smul.addr %s460, 8
        %s462 = scalar_lea.vmem [#allocation7], %s461
        %s463 = sand.u32 %s128, 1
        %s464 = scalar_lea.sflag [#allocation9], %s463
        %s465 = sand.u32 %s128, 1
        %s466 = smul.addr %s465, 8
        %s467 = scalar_lea.vmem [#allocation8], %s466
        // Predicated region
        $region41: #{tpu_custom_call.1} parent=31 // pred_check
          %p468 = pneg %p112
        $region42: #{tpu_custom_call.1} parent=31 // pred_check_branch
          %470 = sbr.rel (%p468) target = $region44
        $region43: #{tpu_custom_call.1} parent=31 // pred_region
          %s472 = ssub.s32 128, 128
          %473 = vsyncadd %s459, %s472
          %s474 = smul.addr %s26, 128
          %s475 = scalar_lea.hbm %s3, %s474
          %s477 = sshll.u32 %s462, 4
          %s478 = int_to_ptr.vmem [resolvable:$true] %s477
          %480 = dma.vmem_to_hbm [thread:$0]  %s478, 128, %s475, %s459
        $region44: #{tpu_custom_call.1} parent=31 // pred_fallthru
          _
        // Predicated region
        $region45: #{tpu_custom_call.1} parent=31 // pred_check
          %p481 = pneg %p138
        $region46: #{tpu_custom_call.1} parent=31 // pred_check_branch
          %483 = sbr.rel (%p481) target = $region48
        $region47: #{tpu_custom_call.1} parent=31 // pred_region
          %s485 = ssub.s32 128, 128
          %486 = vsyncadd %s464, %s485
          %s487 = smul.addr %s26, 128
          %s488 = scalar_lea.hbm %s4, %s487
          %s490 = sshll.u32 %s467, 4
          %s491 = int_to_ptr.vmem [resolvable:$true] %s490
          %493 = dma.vmem_to_hbm [thread:$0]  %s491, 128, %s488, %s464
        $region48: #{tpu_custom_call.1} parent=31 // pred_fallthru
          _
      $region32: #{tpu_custom_call.1} parent=5 // pred_fallthru
        _
      %p494 = scmp.le.s32.totalorder 2, %s21
      // Predicated region
      $region49: #{tpu_custom_call.1} parent=5 // pred_check
        %p495 = pneg %p494
      $region50: #{tpu_custom_call.1} parent=5 // pred_check_branch
        %497 = sbr.rel (%p495) target = $region52
      $region51: #{tpu_custom_call.1} parent=5 // pred_region
        %s498 = ssub.s32 %s21, 2
        // Predicated region
        $region53: #{tpu_custom_call.1} parent=51 // pred_check
          %p499 = pneg %p118
        $region54: #{tpu_custom_call.1} parent=51 // pred_check_branch
          %501 = sbr.rel (%p499) target = $region56
        $region55: #{tpu_custom_call.1} parent=51 // pred_region
          %s502 = sand.u32 %s103, 1
          %s503 = scalar_lea.sflag [#allocation4], %s502
          %s504 = sand.u32 %s103, 1
          %s505 = smul.addr %s504, 8
          %s506 = scalar_lea.vmem [#allocation7], %s505
          %507 = dma.done %s503, 128
        $region56: #{tpu_custom_call.1} parent=51 // pred_fallthru
          _
        // Predicated region
        $region57: #{tpu_custom_call.1} parent=51 // pred_check
          %p508 = pneg %p144
        $region58: #{tpu_custom_call.1} parent=51 // pred_check_branch
          %510 = sbr.rel (%p508) target = $region60
        $region59: #{tpu_custom_call.1} parent=51 // pred_region
          %s511 = sand.u32 %s129, 1
          %s512 = scalar_lea.sflag [#allocation9], %s511
          %s513 = sand.u32 %s129, 1
          %s514 = smul.addr %s513, 8
          %s515 = scalar_lea.vmem [#allocation8], %s514
          %516 = dma.done %s512, 128
        $region60: #{tpu_custom_call.1} parent=51 // pred_fallthru
          _
      $region52: #{tpu_custom_call.1} parent=5 // pred_fallthru
        _
    $region6: #{tpu_custom_call.1} parent=1 // loop_footer
      %s25 = sadd.s32 1, %s21
    $region7: #{tpu_custom_call.1} parent=1 // loop_footer_branch
      %20 = sbr.rel target = $region3
    $region8: #{tpu_custom_call.1} parent=1 // loop_exit
      _
    %517 = vsyncpa [#allocation3], 1
    %s518 = scalar_lea.sflag [#allocation3], 1
    %519 = vsyncpa %s518, 1
    %520 = vsyncpa [#allocation6], 1
    %521 = vsyncpa [#allocation4], 1
    %s522 = scalar_lea.sflag [#allocation4], 1
    %523 = vsyncpa %s522, 1
    %524 = vsyncpa [#allocation9], 1
    %s525 = scalar_lea.sflag [#allocation9], 1
    %526 = vsyncpa %s525, 1

</llo_original>
